<compile_context>
chip_gen: v5e
topology: v5e:2x2
jax: 0.10.0
libtpu: 0.0.40
codegen_flags: <defaults>
</compile_context>

<pallas_src>
import jax
import jax.numpy as jnp
from jax.experimental import pallas as pl
from jax.experimental.pallas import tpu as pltpu

IN_FEATURES = 2 * 2      # 4
OUT_FEATURES = 10
MAX_TM = 8192            # batch tile (rows); amortizes per-grid-step overhead


def linear_kernel(x_ref, w_ref, b_ref, o_ref):
    # x_ref: (tm, 4)  f32  -- batch tile
    # w_ref: (4, 10)  f32  -- W^T, VMEM-resident across the whole grid
    # b_ref: (1, 10)  f32  -- bias row, VMEM-resident
    # o_ref: (tm, 10) f32
    x = x_ref[...]
    w = w_ref[...]
    acc = jnp.broadcast_to(b_ref[...], o_ref.shape)          # (tm, 10)
    # K=4 unrolled VPU multiply-accumulate — deliberately no MXU (K=4 contraction).
    for k in range(IN_FEATURES):
        acc = acc + x[:, k:k + 1] * w[k:k + 1, :]
    o_ref[...] = acc.astype(o_ref.dtype)


def prepare_params(w, b):
    """One-time parameter prep (hoisted out of the per-call path).

    w: (10, 4) f32  -- PyTorch nn.Linear weight layout (out, in)
    b: (10,)   f32
    returns (w_t: (4, 10) f32, b_row: (1, 10) f32)
    """
    w_t = jnp.asarray(w, jnp.float32).T                       # (4, 10)
    b_row = jnp.asarray(b, jnp.float32).reshape(1, OUT_FEATURES)
    return w_t, b_row


def _pick_tm(batch):
    """Batch tile: multiple of 8 sublanes, >=2 grid steps when possible, capped at MAX_TM."""
    if batch <= 8:
        return batch                       # single full-extent block
    half_up = ((batch + 15) // 16) * 8     # ~round_up(cdiv(B, 2), 8)
    return min(MAX_TM, half_up)


def fnn_forward(x, w_t, b_row):
    """Linear(4 -> 10) forward:  y = x @ W^T + b.

    x:     (B, 4)  f32
    w_t:   (4, 10) f32   (from prepare_params)
    b_row: (1, 10) f32   (from prepare_params)
    returns (B, 10) f32
    """
    B = x.shape[0]
    tm = _pick_tm(B)
    num_tiles = pl.cdiv(B, tm)

    return pl.pallas_call(
        linear_kernel,
        out_shape=jax.ShapeDtypeStruct((B, OUT_FEATURES), jnp.float32),
        grid=(num_tiles,),
        in_specs=[
            pl.BlockSpec((tm, IN_FEATURES), lambda i: (i, 0)),            # x batch tile
            pl.BlockSpec((IN_FEATURES, OUT_FEATURES), lambda i: (0, 0)),  # resident W^T
            pl.BlockSpec((1, OUT_FEATURES), lambda i: (0, 0)),            # resident bias
        ],
        out_specs=pl.BlockSpec((tm, OUT_FEATURES), lambda i: (i, 0)),
        compiler_params=pltpu.CompilerParams(
            dimension_semantics=("parallel",),
        ),
    )(x, w_t, b_row)


def init_params(key):
    """Deterministic init matching nn.Linear defaults: U(-1/sqrt(fan_in), +)."""
    kw, kb = jax.random.split(key)
    bound = 1.0 / jnp.sqrt(jnp.float32(IN_FEATURES))
    w = jax.random.uniform(kw, (OUT_FEATURES, IN_FEATURES), jnp.float32, -bound, bound)
    b = jax.random.uniform(kb, (OUT_FEATURES,), jnp.float32, -bound, bound)
    return w, b


if __name__ == "__main__":
    key = jax.random.PRNGKey(0)
    k_x, k_p, k_x2 = jax.random.split(key, 3)

    w, b = init_params(k_p)
    w_t, b_row = prepare_params(w, b)

    # Small shape implied by the module: batch=2, features=2*2.
    batch = 2
    x = jax.random.normal(k_x, (batch, IN_FEATURES), dtype=jnp.float32)
    y = jax.block_until_ready(fnn_forward(x, w_t, b_row))
    y_ref = x @ w.T + b
    assert y.shape == (batch, OUT_FEATURES)
    assert jnp.allclose(y, y_ref, atol=1e-5, rtol=1e-5)

    # Larger batch: exercises multi-tile grid and a partial (masked) final block.
    batch2 = 300
    x2 = jax.random.normal(k_x2, (batch2, IN_FEATURES), dtype=jnp.float32)
    y2 = jax.block_until_ready(fnn_forward(x2, w_t, b_row))
    y2_ref = x2 @ w.T + b
    assert y2.shape == (batch2, OUT_FEATURES)
    assert jnp.allclose(y2, y2_ref, atol=1e-5, rtol=1e-5)

    print("KERNEL_OK")
</pallas_src>

<mosaic_0001>
module attributes {stable_mosaic.version = 11 : i64} {
  func.func @linear_kernel(%arg0: i32, %arg1: memref<2x4xf32, #tpu.memory_space<vmem>>, %arg2: memref<4x10xf32, #tpu.memory_space<vmem>>, %arg3: memref<1x10xf32, #tpu.memory_space<vmem>>, %arg4: memref<2x10xf32, #tpu.memory_space<vmem>>) attributes {dimension_semantics = [#tpu.dimension_semantics<parallel>], iteration_bounds = array<i64: 1>, scalar_prefetch = 0 : i64, scratch_operands = 0 : i64, tpu.core_type = #tpu.core_type<tc>, window_params = [{transform_indices = @transform_0, window_bounds = array<i64: 2, 4>}, {pipeline_mode = #tpu.pipeline_mode<synchronous>, transform_indices = @transform_1, window_bounds = array<i64: 4, 10>}, {pipeline_mode = #tpu.pipeline_mode<synchronous>, transform_indices = @transform_2, window_bounds = array<i64: 1, 10>}, {transform_indices = @transform_3, window_bounds = array<i64: 2, 10>}]} {
    %c0 = arith.constant 0 : index
    %c0_0 = arith.constant 0 : index
    %0 = vector.load %arg1[%c0, %c0_0] : memref<2x4xf32, #tpu.memory_space<vmem>>, vector<2x4xf32>
    %c0_1 = arith.constant 0 : index
    %c0_2 = arith.constant 0 : index
    %1 = vector.load %arg2[%c0_1, %c0_2] : memref<4x10xf32, #tpu.memory_space<vmem>>, vector<4x10xf32>
    %c0_3 = arith.constant 0 : index
    %c0_4 = arith.constant 0 : index
    %2 = vector.load %arg3[%c0_3, %c0_4] : memref<1x10xf32, #tpu.memory_space<vmem>>, vector<1x10xf32>
    %3 = vector.shape_cast %2 : vector<1x10xf32> to vector<1x10xf32>
    %4 = vector.broadcast %3 : vector<1x10xf32> to vector<2x10xf32>
    %5 = vector.extract_strided_slice %0 {offsets = [0, 0], sizes = [2, 1], strides = [1, 1]} : vector<2x4xf32> to vector<2x1xf32>
    %6 = vector.extract_strided_slice %1 {offsets = [0, 0], sizes = [1, 10], strides = [1, 1]} : vector<4x10xf32> to vector<1x10xf32>
    %7 = vector.broadcast %5 : vector<2x1xf32> to vector<2x10xf32>
    %8 = vector.broadcast %6 : vector<1x10xf32> to vector<2x10xf32>
    %9 = arith.mulf %7, %8 : vector<2x10xf32>
    %10 = arith.addf %4, %9 : vector<2x10xf32>
    %11 = vector.extract_strided_slice %0 {offsets = [0, 1], sizes = [2, 1], strides = [1, 1]} : vector<2x4xf32> to vector<2x1xf32>
    %12 = vector.extract_strided_slice %1 {offsets = [1, 0], sizes = [1, 10], strides = [1, 1]} : vector<4x10xf32> to vector<1x10xf32>
    %13 = vector.broadcast %11 : vector<2x1xf32> to vector<2x10xf32>
    %14 = vector.broadcast %12 : vector<1x10xf32> to vector<2x10xf32>
    %15 = arith.mulf %13, %14 : vector<2x10xf32>
    %16 = arith.addf %10, %15 : vector<2x10xf32>
    %17 = vector.extract_strided_slice %0 {offsets = [0, 2], sizes = [2, 1], strides = [1, 1]} : vector<2x4xf32> to vector<2x1xf32>
    %18 = vector.extract_strided_slice %1 {offsets = [2, 0], sizes = [1, 10], strides = [1, 1]} : vector<4x10xf32> to vector<1x10xf32>
    %19 = vector.broadcast %17 : vector<2x1xf32> to vector<2x10xf32>
    %20 = vector.broadcast %18 : vector<1x10xf32> to vector<2x10xf32>
    %21 = arith.mulf %19, %20 : vector<2x10xf32>
    %22 = arith.addf %16, %21 : vector<2x10xf32>
    %23 = vector.extract_strided_slice %0 {offsets = [0, 3], sizes = [2, 1], strides = [1, 1]} : vector<2x4xf32> to vector<2x1xf32>
    %24 = vector.extract_strided_slice %1 {offsets = [3, 0], sizes = [1, 10], strides = [1, 1]} : vector<4x10xf32> to vector<1x10xf32>
    %25 = vector.broadcast %23 : vector<2x1xf32> to vector<2x10xf32>
    %26 = vector.broadcast %24 : vector<1x10xf32> to vector<2x10xf32>
    %27 = arith.mulf %25, %26 : vector<2x10xf32>
    %28 = arith.addf %22, %27 : vector<2x10xf32>
    %c0_5 = arith.constant 0 : index
    %c0_6 = arith.constant 0 : index
    %29 = vector.load %arg4[%c0_5, %c0_6] : memref<2x10xf32, #tpu.memory_space<vmem>>, vector<2x10xf32>
    tpu.vector_store %arg4[%c0_5, %c0_6], %28 {strides = array<i32>} : memref<2x10xf32, #tpu.memory_space<vmem>>, vector<2x10xf32>,
    return
  }
  func.func @transform_0(%arg0: i32) -> (i32, i32) {
    %c0_i32 = arith.constant 0 : i32
    %c0_i32_0 = arith.constant 0 : i32
    return %arg0, %c0_i32 : i32, i32
  }
  func.func @transform_1(%arg0: i32) -> (i32, i32) {
    %c0_i32 = arith.constant 0 : i32
    %c0_i32_0 = arith.constant 0 : i32
    %c0_i32_1 = arith.constant 0 : i32
    return %c0_i32, %c0_i32_0 : i32, i32
  }
  func.func @transform_2(%arg0: i32) -> (i32, i32) {
    %c0_i32 = arith.constant 0 : i32
    %c0_i32_0 = arith.constant 0 : i32
    %c0_i32_1 = arith.constant 0 : i32
    return %c0_i32, %c0_i32_0 : i32, i32
  }
  func.func @transform_3(%arg0: i32) -> (i32, i32) {
    %c0_i32 = arith.constant 0 : i32
    %c0_i32_0 = arith.constant 0 : i32
    return %arg0, %c0_i32 : i32, i32
  }
}

</mosaic_0001>

<llo_original>
// kernel: tpu_custom_call.1
$region0: #{tpu_custom_call.1}
  #allocation0 [shape = 'u32[]', space=smem, size = 0x4, offset = 0x4, fixed_abs, tag = 'smem constant byte address 0x4 - core index']
  #allocation1 [shape = 'u32[72,128]{1,0:T(1,128)}', space=vmem, size = 0x9000, scoped, tag = 'internal scratch']
  %s0 = inlined_call_operand.hbm [shape: f32[2,4], index: 0, kind: input, shape index: {}]
  %s1 = inlined_call_operand.hbm [shape: f32[4,10], index: 1, kind: input, shape index: {}]
  %s2 = inlined_call_operand.vmem [shape: f32[1,10], index: 2, kind: input, shape index: {}]
  %s3 = inlined_call_operand.hbm [shape: f32[2,10], index: 3, kind: output, shape index: {}]
  %s4 = sld [smem:[#allocation0]]
  $region30: #{tpu_custom_call.1} parent=0
    _
  %s6 = ssub.s32 1, %s4
  %s7 = scalar_select 0, %s6, %s4
  $region1: #{tpu_custom_call.1} parent=0
    #allocation2 [shape = 'u8[1024]{0}', space=vmem, size = 0x400, scoped, tag = 'input window, operand 0, single buffered']
    #allocation3 [shape = 's32[1]{0}', space=sflag, size = 0x4, scoped, tag = 'scoped memory for tpu_custom_call.1']
    #allocation4 [shape = 's32[1]{0}', space=sflag, size = 0x4, scoped, tag = 'scoped memory for tpu_custom_call.1']
    #allocation5 [shape = 'u8[2048]{0}', space=vmem, size = 0x800, scoped, tag = 'input window, operand 1, single buffered']
    #allocation6 [shape = 's32[1]{0}', space=sflag, size = 0x4, scoped, tag = 'scoped memory for tpu_custom_call.1']
    #allocation7 [shape = 'u8[1024]{0}', space=vmem, size = 0x400, scoped, tag = 'output window, operand 0, single buffered']
    %8 = vsyncpa [#allocation3], 0
    %9 = vsyncpa [#allocation6], 0
    %10 = vsyncpa [#allocation4], 0
    // Predicated region
    $region2: #{tpu_custom_call.1} parent=1 // pred_check
      _
    $region3: #{tpu_custom_call.1} parent=1 // pred_check_branch
      %12 = sbr.rel (0) target = $region5
    $region4: #{tpu_custom_call.1} parent=1 // pred_region
      %14 = vsyncadd [#allocation3], 0
      %s16 = sshll.u32 %s0, 4
      %s17 = int_to_ptr.hbm [resolvable:$true] %s16
      %s18 = sshll.u32 [#allocation2], 4
      %s19 = int_to_ptr.vmem [resolvable:$true] %s18
      %21 = dma.hbm_to_vmem [thread:$0]  %s17, 32, %s19, [#allocation3]
    $region5: #{tpu_custom_call.1} parent=1 // pred_fallthru
      _
    // Predicated region
    $region6: #{tpu_custom_call.1} parent=1 // pred_check
      _
    $region7: #{tpu_custom_call.1} parent=1 // pred_check_branch
      %23 = sbr.rel (0) target = $region9
    $region8: #{tpu_custom_call.1} parent=1 // pred_region
      %25 = vsyncadd [#allocation6], 0
      %s27 = sshll.u32 %s1, 4
      %s28 = int_to_ptr.hbm [resolvable:$true] %s27
      %s29 = sshll.u32 [#allocation5], 4
      %s30 = int_to_ptr.vmem [resolvable:$true] %s29
      %32 = dma.hbm_to_vmem [thread:$0]  %s28, 64, %s30, [#allocation6]
    $region9: #{tpu_custom_call.1} parent=1 // pred_fallthru
      _
    // Predicated region
    $region10: #{tpu_custom_call.1} parent=1 // pred_check
      _
    $region11: #{tpu_custom_call.1} parent=1 // pred_check_branch
      %34 = sbr.rel (0) target = $region13
    $region12: #{tpu_custom_call.1} parent=1 // pred_region
      _
    $region13: #{tpu_custom_call.1} parent=1 // pred_fallthru
      _
    // Predicated region
    $region14: #{tpu_custom_call.1} parent=1 // pred_check
      _
    $region15: #{tpu_custom_call.1} parent=1 // pred_check_branch
      %36 = sbr.rel (0) target = $region17
    $region16: #{tpu_custom_call.1} parent=1 // pred_region
      %38 = dma.done [#allocation3], 32
    $region17: #{tpu_custom_call.1} parent=1 // pred_fallthru
      _
    // Predicated region
    $region18: #{tpu_custom_call.1} parent=1 // pred_check
      _
    $region19: #{tpu_custom_call.1} parent=1 // pred_check_branch
      %40 = sbr.rel (0) target = $region21
    $region20: #{tpu_custom_call.1} parent=1 // pred_region
      %42 = dma.done [#allocation6], 64
    $region21: #{tpu_custom_call.1} parent=1 // pred_fallthru
      _
    %v43 = vld [vmem:[#allocation2] sm:$0x3]
    %v44 = vld [vmem:[#allocation5] sm:$0xf]
    %v45 = vld [vmem:[%s2] sm:$0x1]
    %v47 = vperm.slane %v45, 0
    %50 = vset.pattern.permute.xlu0 0
    %51 = vperm.xlu0 %50, %v43
    %v52 = vpop.permute.xlu0 %51
    %v54 = vperm.slane %v44, 0
    %v55 = vmul.f32 %v52, %v54
    %v56 = vadd.f32 %v47, %v55
    %57 = vset.pattern.permute.xlu0 1
    %58 = vperm.xlu0 %57, %v43
    %v59 = vpop.permute.xlu0 %58
    %v61 = vperm.slane %v44, 1
    %v62 = vmul.f32 %v59, %v61
    %v63 = vadd.f32 %v56, %v62
    %64 = vset.pattern.permute.xlu0 2
    %65 = vperm.xlu0 %64, %v43
    %v66 = vpop.permute.xlu0 %65
    %v68 = vperm.slane %v44, 2
    %v69 = vmul.f32 %v66, %v68
    %v70 = vadd.f32 %v63, %v69
    %71 = vset.pattern.permute.xlu0 3
    %72 = vperm.xlu0 %71, %v43
    %v73 = vpop.permute.xlu0 %72
    %v75 = vperm.slane %v44, 3
    %v76 = vmul.f32 %v73, %v75
    %v77 = vadd.f32 %v70, %v76
    %vm78 = vcmask 74752
    %79 = vst.msk [vmem:[#allocation7] sm:$0x3] %vm78, %v77
    // Predicated region
    $region22: #{tpu_custom_call.1} parent=1 // pred_check
      _
    $region23: #{tpu_custom_call.1} parent=1 // pred_check_branch
      %81 = sbr.rel (0) target = $region25
    $region24: #{tpu_custom_call.1} parent=1 // pred_region
      %83 = vsyncadd [#allocation4], 0
      %s85 = sshll.u32 [#allocation7], 4
      %s86 = int_to_ptr.vmem [resolvable:$true] %s85
      %s87 = sshll.u32 %s3, 4
      %s88 = int_to_ptr.hbm [resolvable:$true] %s87
      %90 = dma.vmem_to_hbm [thread:$0]  %s86, 32, %s88, [#allocation4]
    $region25: #{tpu_custom_call.1} parent=1 // pred_fallthru
      _
    // Predicated region
    $region26: #{tpu_custom_call.1} parent=1 // pred_check
      _
    $region27: #{tpu_custom_call.1} parent=1 // pred_check_branch
      %92 = sbr.rel (0) target = $region29
    $region28: #{tpu_custom_call.1} parent=1 // pred_region
      %94 = dma.done [#allocation4], 32
    $region29: #{tpu_custom_call.1} parent=1 // pred_fallthru
      _
    %95 = vsyncpa [#allocation3], 1
    %96 = vsyncpa [#allocation6], 1
    %97 = vsyncpa [#allocation4], 1

</llo_original>
